<compile_context>
chip_gen: v7x
topology: tpu7x:2x2x1
jax: 0.10.0
libtpu: 0.0.40
codegen_flags: <defaults>
</compile_context>

<pallas_src>
import functools

import jax
import jax.numpy as jnp
from jax import lax
from jax.experimental import pallas as pl
from jax.experimental.pallas import tpu as pltpu

LOG_STD_MAX = 1.0
LOG_STD_MIN = -1.0
LN_EPS = 1e-5  # PyTorch nn.LayerNorm default

LANE = 128
SUBLANE = 8
BIG = 3.0e38  # finite "no clamp" sentinel for the mean / padded columns


def _round_up(x, m):
    return (x + m - 1) // m * m


def _choose_tiling(batch, max_tile_b=512):
    """Pick (tile_b, padded_batch) so that:
       - small batches (<= 32 rows) run as a single step (pure latency),
       - otherwise the grid has >= 2 steps (v7x megacore) and tiles are <= ~512 rows
         (v5e/v6e DMA efficiency), with minimal dead-row padding."""
    b8 = _round_up(batch, SUBLANE)
    if b8 <= 4 * SUBLANE:
        return b8, b8
    n_steps = max(2, pl.cdiv(b8, max_tile_b))
    tile_b = _round_up(pl.cdiv(b8, n_steps), SUBLANE)
    return tile_b, tile_b * n_steps


def _layer_norm(h, gamma, beta):
    # f32 math throughout; rsqrt goes to the EUP (free slot vs the VALU).
    mu = jnp.mean(h, axis=-1, keepdims=True)
    d = h - mu
    var = jnp.mean(d * d, axis=-1, keepdims=True)
    return d * lax.rsqrt(var + LN_EPS) * gamma + beta


def actor_kernel(x_ref,
                 w1_ref, b1_ref, g1_ref, be1_ref,
                 w2_ref, b2_ref, g2_ref, be2_ref,
                 wh_ref, bh_ref, lo_ref, hi_ref,
                 out_ref, *, out_cols):
    # (TILE_B, 33) f32 -> bf16 for the MXU; K=33 is padded internally by Mosaic.
    x = x_ref[...].astype(jnp.bfloat16)

    # fc1 -> ln1 -> relu  (bf16 MXU, f32 accumulation + f32 LN math)
    h = jnp.dot(x, w1_ref[...], preferred_element_type=jnp.float32) + b1_ref[...]
    h = jnp.maximum(_layer_norm(h, g1_ref[...], be1_ref[...]), 0.0)

    # fc2 -> ln2 -> relu
    h = jnp.dot(h.astype(jnp.bfloat16), w2_ref[...],
                preferred_element_type=jnp.float32) + b2_ref[...]
    h = jnp.maximum(_layer_norm(h, g2_ref[...], be2_ref[...]), 0.0)

    # Fused heads, 128 lanes wide for the MXU:
    #   cols [0, A)   = mean          (lo/hi = -BIG/+BIG -> clamp is a no-op)
    #   cols [A, 2A)  = log_std       (lo/hi = -1/+1)
    #   cols [2A,128) = zero padding  (discarded by the narrow store)
    out = jnp.dot(h.astype(jnp.bfloat16), wh_ref[...],
                  preferred_element_type=jnp.float32) + bh_ref[...]
    out = jnp.minimum(jnp.maximum(out, lo_ref[...]), hi_ref[...])

    # Narrow store: only the 2*A useful columns are written back to HBM.
    out_ref[...] = out[:, :out_cols]


def prepare_params(params):
    """One-time packing of the PyTorch-style params for the kernel:
       fuses the two heads into one lane-padded matrix, builds the clamp vectors,
       and casts matmul weights to bf16.  Call once; reuse across forward calls."""
    A = params["wm"].shape[1]
    H2 = params["w2"].shape[1]
    head_pad = max(LANE, _round_up(2 * A, LANE))

    wh = (jnp.zeros((H2, head_pad), jnp.float32)
          .at[:, :A].set(params["wm"])
          .at[:, A:2 * A].set(params["ws"])
          .astype(jnp.bfloat16))
    bh = (jnp.zeros((1, head_pad), jnp.float32)
          .at[:, :A].set(params["bm"])
          .at[:, A:2 * A].set(params["bs"]))

    col = jnp.arange(head_pad)[None, :]
    is_log_std = (col >= A) & (col < 2 * A)
    lo = jnp.where(is_log_std, LOG_STD_MIN, -BIG).astype(jnp.float32)
    hi = jnp.where(is_log_std, LOG_STD_MAX, BIG).astype(jnp.float32)

    return {
        "w1": params["w1"].astype(jnp.bfloat16),
        "b1": params["b1"], "g1": params["g1"], "be1": params["be1"],
        "w2": params["w2"].astype(jnp.bfloat16),
        "b2": params["b2"], "g2": params["g2"], "be2": params["be2"],
        "wh": wh, "bh": bh, "lo": lo, "hi": hi,
        "action_size": A, "head_pad": head_pad,
    }


def actor_forward(state, prep, *, max_tile_b=512):
    """state: (B, state_size) f32; prep: output of prepare_params()."""
    B, S = state.shape
    H1 = prep["w1"].shape[1]
    H2 = prep["w2"].shape[1]
    A = prep["action_size"]
    head_pad = prep["head_pad"]
    out_cols = 2 * A

    tile_b, B_pad = _choose_tiling(B, max_tile_b)
    grid = (B_pad // tile_b,)

    # Only the batch axis is (possibly) padded; feature dim stays at its raw 33.
    if B_pad == B:
        x = state
    else:
        x = jnp.zeros((B_pad, S), state.dtype).at[:B].set(state)

    args = (x,
            prep["w1"], prep["b1"], prep["g1"], prep["be1"],
            prep["w2"], prep["b2"], prep["g2"], prep["be2"],
            prep["wh"], prep["bh"], prep["lo"], prep["hi"])

    def const(shape):
        # Same block every grid step -> stays VMEM-resident (not re-DMA'd per step).
        return pl.BlockSpec(shape, lambda i: (0, 0))

    in_specs = [
        pl.BlockSpec((tile_b, S), lambda i: (i, 0)),          # streamed activations
        const((S, H1)), const((1, H1)), const((1, H1)), const((1, H1)),
        const((H1, H2)), const((1, H2)), const((1, H2)), const((1, H2)),
        const((H2, head_pad)), const((1, head_pad)),
        const((1, head_pad)), const((1, head_pad)),
    ]
    out_spec = pl.BlockSpec((tile_b, out_cols), lambda i: (i, 0))

    flops = 2 * B_pad * (S * H1 + H1 * H2 + H2 * head_pad)
    bytes_accessed = (
        B_pad * S * 4                                          # f32 state in
        + (prep["w1"].size + prep["w2"].size + prep["wh"].size) * 2   # bf16 weights
        + (3 * H1 + 3 * H2 + 3 * head_pad) * 4                 # f32 biases/LN/clamp
        + B_pad * out_cols * 4                                 # narrow f32 output
    )

    out = pl.pallas_call(
        functools.partial(actor_kernel, out_cols=out_cols),
        out_shape=jax.ShapeDtypeStruct((B_pad, out_cols), jnp.float32),
        grid=grid,
        in_specs=in_specs,
        out_specs=out_spec,
        compiler_params=pltpu.CompilerParams(
            dimension_semantics=("parallel",)),   # shards batch tiles across v7x's 2 TCs
        cost_estimate=pl.CostEstimate(
            flops=flops, transcendentals=2 * B_pad, bytes_accessed=bytes_accessed),
    )(*args)

    mean = out[:B, :A]
    log_std = out[:B, A:2 * A]
    return mean, log_std


def init_params(key, state_size=33, action_size=4, hidden1=256, hidden2=256):
    """Deterministic init mirroring the PyTorch module's weights_init_ scheme."""
    ks = jax.random.split(key, 4)

    def xavier(k, fan_in, fan_out):
        limit = jnp.sqrt(6.0 / (fan_in + fan_out))
        return jax.random.uniform(k, (fan_in, fan_out), jnp.float32, -limit, limit)

    return {
        # fc1 / fc2 / mean_fc: xavier_uniform weights, zero bias (out_features > 1)
        "w1": xavier(ks[0], state_size, hidden1),
        "b1": jnp.zeros((1, hidden1), jnp.float32),
        "g1": jnp.ones((1, hidden1), jnp.float32),
        "be1": jnp.zeros((1, hidden1), jnp.float32),
        "w2": xavier(ks[1], hidden1, hidden2),
        "b2": jnp.zeros((1, hidden2), jnp.float32),
        "g2": jnp.ones((1, hidden2), jnp.float32),
        "be2": jnp.zeros((1, hidden2), jnp.float32),
        "wm": xavier(ks[2], hidden2, action_size),
        "bm": jnp.zeros((1, action_size), jnp.float32),
        # log_std_fc: uniform(-0.003, 0.003) weight, bias = -2.0
        "ws": jax.random.uniform(ks[3], (hidden2, action_size), jnp.float32, -0.003, 0.003),
        "bs": jnp.full((1, action_size), -2.0, jnp.float32),
    }


def actor_forward_ref(state, params):
    """Pure-JAX reference using the same bf16-matmul / f32-everything-else recipe."""
    bf = jnp.bfloat16

    def ln(h, g, b):
        mu = jnp.mean(h, axis=-1, keepdims=True)
        var = jnp.mean((h - mu) ** 2, axis=-1, keepdims=True)
        return (h - mu) / jnp.sqrt(var + LN_EPS) * g + b

    h = jnp.dot(state.astype(bf), params["w1"].astype(bf),
                preferred_element_type=jnp.float32) + params["b1"]
    h = jnp.maximum(ln(h, params["g1"], params["be1"]), 0.0)
    h = jnp.dot(h.astype(bf), params["w2"].astype(bf),
                preferred_element_type=jnp.float32) + params["b2"]
    h = jnp.maximum(ln(h, params["g2"], params["be2"]), 0.0)
    mean = jnp.dot(h.astype(bf), params["wm"].astype(bf),
                   preferred_element_type=jnp.float32) + params["bm"]
    log_std = jnp.dot(h.astype(bf), params["ws"].astype(bf),
                      preferred_element_type=jnp.float32) + params["bs"]
    log_std = jnp.clip(log_std, LOG_STD_MIN, LOG_STD_MAX)
    return mean, log_std


# TODO(synk): Actor.sample() (Normal rsample + tanh squash + log_prob) is not part of
# forward() and is left to the JAX wrapper level.

if __name__ == "__main__":
    key = jax.random.PRNGKey(0)
    k_param, k_state = jax.random.split(key)

    # B=40 exercises the multi-step grid (2 tiles of 24 rows, 8 dead rows) while
    # staying small; STATE/ACTION/H match the PyTorch module defaults.
    B, STATE, ACTION, H1, H2 = 40, 33, 4, 256, 256
    params = init_params(k_param, STATE, ACTION, H1, H2)
    prep = prepare_params(params)   # one-time weight packing (hoisted out of forward)
    state = jax.random.normal(k_state, (B, STATE), jnp.float32)

    mean, log_std = actor_forward(state, prep)
    jax.block_until_ready((mean, log_std))

    mean_ref, log_std_ref = actor_forward_ref(state, params)
    assert mean.shape == (B, ACTION) and log_std.shape == (B, ACTION)
    assert jnp.allclose(mean, mean_ref, atol=2e-3, rtol=2e-3)
    assert jnp.allclose(log_std, log_std_ref, atol=2e-3, rtol=2e-3)
    assert jnp.all(log_std >= LOG_STD_MIN) and jnp.all(log_std <= LOG_STD_MAX)

    print("KERNEL_OK")
</pallas_src>

<mosaic_0001>
module attributes {stable_mosaic.version = 11 : i64} {
  func.func @actor_kernel(%arg0: i32, %arg1: memref<24x33xf32, #tpu.memory_space<vmem>>, %arg2: memref<33x256xbf16, #tpu.memory_space<vmem>>, %arg3: memref<1x256xf32, #tpu.memory_space<vmem>>, %arg4: memref<1x256xf32, #tpu.memory_space<vmem>>, %arg5: memref<1x256xf32, #tpu.memory_space<vmem>>, %arg6: memref<256x256xbf16, #tpu.memory_space<vmem>>, %arg7: memref<1x256xf32, #tpu.memory_space<vmem>>, %arg8: memref<1x256xf32, #tpu.memory_space<vmem>>, %arg9: memref<1x256xf32, #tpu.memory_space<vmem>>, %arg10: memref<256x128xbf16, #tpu.memory_space<vmem>>, %arg11: memref<1x128xf32, #tpu.memory_space<vmem>>, %arg12: memref<1x128xf32, #tpu.memory_space<vmem>>, %arg13: memref<1x128xf32, #tpu.memory_space<vmem>>, %arg14: memref<24x8xf32, #tpu.memory_space<vmem>>) attributes {dimension_semantics = [#tpu.dimension_semantics<parallel>], iteration_bounds = array<i64: 2>, scalar_prefetch = 0 : i64, scratch_operands = 0 : i64, tpu.core_type = #tpu.core_type<tc>, window_params = [{transform_indices = @transform_0, window_bounds = array<i64: 24, 33>}, {pipeline_mode = #tpu.pipeline_mode<synchronous>, transform_indices = @transform_1, window_bounds = array<i64: 33, 256>}, {pipeline_mode = #tpu.pipeline_mode<synchronous>, transform_indices = @transform_2, window_bounds = array<i64: 1, 256>}, {pipeline_mode = #tpu.pipeline_mode<synchronous>, transform_indices = @transform_3, window_bounds = array<i64: 1, 256>}, {pipeline_mode = #tpu.pipeline_mode<synchronous>, transform_indices = @transform_4, window_bounds = array<i64: 1, 256>}, {pipeline_mode = #tpu.pipeline_mode<synchronous>, transform_indices = @transform_5, window_bounds = array<i64: 256, 256>}, {pipeline_mode = #tpu.pipeline_mode<synchronous>, transform_indices = @transform_6, window_bounds = array<i64: 1, 256>}, {pipeline_mode = #tpu.pipeline_mode<synchronous>, transform_indices = @transform_7, window_bounds = array<i64: 1, 256>}, {pipeline_mode = #tpu.pipeline_mode<synchronous>, transform_indices = @transform_8, window_bounds = array<i64: 1, 256>}, {pipeline_mode = #tpu.pipeline_mode<synchronous>, transform_indices = @transform_9, window_bounds = array<i64: 256, 128>}, {pipeline_mode = #tpu.pipeline_mode<synchronous>, transform_indices = @transform_10, window_bounds = array<i64: 1, 128>}, {pipeline_mode = #tpu.pipeline_mode<synchronous>, transform_indices = @transform_11, window_bounds = array<i64: 1, 128>}, {pipeline_mode = #tpu.pipeline_mode<synchronous>, transform_indices = @transform_12, window_bounds = array<i64: 1, 128>}, {transform_indices = @transform_13, window_bounds = array<i64: 24, 8>}]} {
    %c0 = arith.constant 0 : index
    %c0_0 = arith.constant 0 : index
    %0 = vector.load %arg1[%c0, %c0_0] : memref<24x33xf32, #tpu.memory_space<vmem>>, vector<24x33xf32>
    %1 = arith.truncf %0 : vector<24x33xf32> to vector<24x33xbf16>
    %c0_1 = arith.constant 0 : index
    %c0_2 = arith.constant 0 : index
    %2 = vector.load %arg2[%c0_1, %c0_2] : memref<33x256xbf16, #tpu.memory_space<vmem>>, vector<33x256xbf16>
    %cst = arith.constant dense<0.000000e+00> : vector<24x256xf32>
    %3 = tpu.matmul %1, %2, %cst {dimension_numbers = #tpu.dot_dimension_numbers<[1], [0], [0], [1], [0, 0, 1, 1], [], []>} : vector<24x33xbf16>, vector<33x256xbf16>, vector<24x256xf32> -> vector<24x256xf32>
    %c0_3 = arith.constant 0 : index
    %c0_4 = arith.constant 0 : index
    %4 = vector.load %arg3[%c0_3, %c0_4] : memref<1x256xf32, #tpu.memory_space<vmem>>, vector<1x256xf32>
    %5 = vector.broadcast %4 : vector<1x256xf32> to vector<24x256xf32>
    %6 = arith.addf %3, %5 : vector<24x256xf32>
    %c0_5 = arith.constant 0 : index
    %c0_6 = arith.constant 0 : index
    %7 = vector.load %arg4[%c0_5, %c0_6] : memref<1x256xf32, #tpu.memory_space<vmem>>, vector<1x256xf32>
    %c0_7 = arith.constant 0 : index
    %c0_8 = arith.constant 0 : index
    %8 = vector.load %arg5[%c0_7, %c0_8] : memref<1x256xf32, #tpu.memory_space<vmem>>, vector<1x256xf32>
    %cst_9 = arith.constant dense<0.000000e+00> : vector<24xf32>
    %9 = vector.multi_reduction <add>, %6, %cst_9 [1] : vector<24x256xf32> to vector<24xf32>
    %10 = vector.shape_cast %9 : vector<24xf32> to vector<24x1xf32>
    %cst_10 = arith.constant 2.560000e+02 : f32
    %11 = vector.broadcast %cst_10 : f32 to vector<24x1xf32>
    %12 = arith.divf %10, %11 : vector<24x1xf32>
    %13 = vector.broadcast %12 : vector<24x1xf32> to vector<24x256xf32>
    %14 = arith.subf %6, %13 : vector<24x256xf32>
    %15 = arith.mulf %14, %14 : vector<24x256xf32>
    %cst_11 = arith.constant dense<0.000000e+00> : vector<24xf32>
    %16 = vector.multi_reduction <add>, %15, %cst_11 [1] : vector<24x256xf32> to vector<24xf32>
    %17 = vector.shape_cast %16 : vector<24xf32> to vector<24x1xf32>
    %cst_12 = arith.constant 2.560000e+02 : f32
    %18 = vector.broadcast %cst_12 : f32 to vector<24x1xf32>
    %19 = arith.divf %17, %18 : vector<24x1xf32>
    %cst_13 = arith.constant 9.99999974E-6 : f32
    %20 = vector.broadcast %cst_13 : f32 to vector<24x1xf32>
    %21 = arith.addf %19, %20 : vector<24x1xf32>
    %22 = math.rsqrt %21 : vector<24x1xf32>
    %23 = vector.broadcast %22 : vector<24x1xf32> to vector<24x256xf32>
    %24 = arith.mulf %14, %23 : vector<24x256xf32>
    %25 = vector.broadcast %7 : vector<1x256xf32> to vector<24x256xf32>
    %26 = arith.mulf %24, %25 : vector<24x256xf32>
    %27 = vector.broadcast %8 : vector<1x256xf32> to vector<24x256xf32>
    %28 = arith.addf %26, %27 : vector<24x256xf32>
    %cst_14 = arith.constant 0.000000e+00 : f32
    %29 = vector.broadcast %cst_14 : f32 to vector<24x256xf32>
    %30 = arith.maximumf %28, %29 : vector<24x256xf32>
    %31 = arith.truncf %30 : vector<24x256xf32> to vector<24x256xbf16>
    %c0_15 = arith.constant 0 : index
    %c0_16 = arith.constant 0 : index
    %32 = vector.load %arg6[%c0_15, %c0_16] : memref<256x256xbf16, #tpu.memory_space<vmem>>, vector<256x256xbf16>
    %cst_17 = arith.constant dense<0.000000e+00> : vector<24x256xf32>
    %33 = tpu.matmul %31, %32, %cst_17 {dimension_numbers = #tpu.dot_dimension_numbers<[1], [0], [0], [1], [0, 0, 1, 1], [], []>} : vector<24x256xbf16>, vector<256x256xbf16>, vector<24x256xf32> -> vector<24x256xf32>
    %c0_18 = arith.constant 0 : index
    %c0_19 = arith.constant 0 : index
    %34 = vector.load %arg7[%c0_18, %c0_19] : memref<1x256xf32, #tpu.memory_space<vmem>>, vector<1x256xf32>
    %35 = vector.broadcast %34 : vector<1x256xf32> to vector<24x256xf32>
    %36 = arith.addf %33, %35 : vector<24x256xf32>
    %c0_20 = arith.constant 0 : index
    %c0_21 = arith.constant 0 : index
    %37 = vector.load %arg8[%c0_20, %c0_21] : memref<1x256xf32, #tpu.memory_space<vmem>>, vector<1x256xf32>
    %c0_22 = arith.constant 0 : index
    %c0_23 = arith.constant 0 : index
    %38 = vector.load %arg9[%c0_22, %c0_23] : memref<1x256xf32, #tpu.memory_space<vmem>>, vector<1x256xf32>
    %cst_24 = arith.constant dense<0.000000e+00> : vector<24xf32>
    %39 = vector.multi_reduction <add>, %36, %cst_24 [1] : vector<24x256xf32> to vector<24xf32>
    %40 = vector.shape_cast %39 : vector<24xf32> to vector<24x1xf32>
    %cst_25 = arith.constant 2.560000e+02 : f32
    %41 = vector.broadcast %cst_25 : f32 to vector<24x1xf32>
    %42 = arith.divf %40, %41 : vector<24x1xf32>
    %43 = vector.broadcast %42 : vector<24x1xf32> to vector<24x256xf32>
    %44 = arith.subf %36, %43 : vector<24x256xf32>
    %45 = arith.mulf %44, %44 : vector<24x256xf32>
    %cst_26 = arith.constant dense<0.000000e+00> : vector<24xf32>
    %46 = vector.multi_reduction <add>, %45, %cst_26 [1] : vector<24x256xf32> to vector<24xf32>
    %47 = vector.shape_cast %46 : vector<24xf32> to vector<24x1xf32>
    %cst_27 = arith.constant 2.560000e+02 : f32
    %48 = vector.broadcast %cst_27 : f32 to vector<24x1xf32>
    %49 = arith.divf %47, %48 : vector<24x1xf32>
    %cst_28 = arith.constant 9.99999974E-6 : f32
    %50 = vector.broadcast %cst_28 : f32 to vector<24x1xf32>
    %51 = arith.addf %49, %50 : vector<24x1xf32>
    %52 = math.rsqrt %51 : vector<24x1xf32>
    %53 = vector.broadcast %52 : vector<24x1xf32> to vector<24x256xf32>
    %54 = arith.mulf %44, %53 : vector<24x256xf32>
    %55 = vector.broadcast %37 : vector<1x256xf32> to vector<24x256xf32>
    %56 = arith.mulf %54, %55 : vector<24x256xf32>
    %57 = vector.broadcast %38 : vector<1x256xf32> to vector<24x256xf32>
    %58 = arith.addf %56, %57 : vector<24x256xf32>
    %cst_29 = arith.constant 0.000000e+00 : f32
    %59 = vector.broadcast %cst_29 : f32 to vector<24x256xf32>
    %60 = arith.maximumf %58, %59 : vector<24x256xf32>
    %61 = arith.truncf %60 : vector<24x256xf32> to vector<24x256xbf16>
    %c0_30 = arith.constant 0 : index
    %c0_31 = arith.constant 0 : index
    %62 = vector.load %arg10[%c0_30, %c0_31] : memref<256x128xbf16, #tpu.memory_space<vmem>>, vector<256x128xbf16>
    %cst_32 = arith.constant dense<0.000000e+00> : vector<24x128xf32>
    %63 = tpu.matmul %61, %62, %cst_32 {dimension_numbers = #tpu.dot_dimension_numbers<[1], [0], [0], [1], [0, 0, 1, 1], [], []>} : vector<24x256xbf16>, vector<256x128xbf16>, vector<24x128xf32> -> vector<24x128xf32>
    %c0_33 = arith.constant 0 : index
    %c0_34 = arith.constant 0 : index
    %64 = vector.load %arg11[%c0_33, %c0_34] : memref<1x128xf32, #tpu.memory_space<vmem>>, vector<1x128xf32>
    %65 = vector.broadcast %64 : vector<1x128xf32> to vector<24x128xf32>
    %66 = arith.addf %63, %65 : vector<24x128xf32>
    %c0_35 = arith.constant 0 : index
    %c0_36 = arith.constant 0 : index
    %67 = vector.load %arg12[%c0_35, %c0_36] : memref<1x128xf32, #tpu.memory_space<vmem>>, vector<1x128xf32>
    %68 = vector.broadcast %67 : vector<1x128xf32> to vector<24x128xf32>
    %69 = arith.maximumf %66, %68 : vector<24x128xf32>
    %c0_37 = arith.constant 0 : index
    %c0_38 = arith.constant 0 : index
    %70 = vector.load %arg13[%c0_37, %c0_38] : memref<1x128xf32, #tpu.memory_space<vmem>>, vector<1x128xf32>
    %71 = vector.broadcast %70 : vector<1x128xf32> to vector<24x128xf32>
    %72 = arith.minimumf %69, %71 : vector<24x128xf32>
    %73 = vector.extract_strided_slice %72 {offsets = [0, 0], sizes = [24, 8], strides = [1, 1]} : vector<24x128xf32> to vector<24x8xf32>
    %c0_39 = arith.constant 0 : index
    %c0_40 = arith.constant 0 : index
    %74 = vector.load %arg14[%c0_39, %c0_40] : memref<24x8xf32, #tpu.memory_space<vmem>>, vector<24x8xf32>
    tpu.vector_store %arg14[%c0_39, %c0_40], %73 {strides = array<i32>} : memref<24x8xf32, #tpu.memory_space<vmem>>, vector<24x8xf32>,
    return
  }
  func.func @transform_0(%arg0: i32) -> (i32, i32) {
    %c0_i32 = arith.constant 0 : i32
    %c0_i32_0 = arith.constant 0 : i32
    return %arg0, %c0_i32 : i32, i32
  }
  func.func @transform_1(%arg0: i32) -> (i32, i32) {
    %c0_i32 = arith.constant 0 : i32
    %c0_i32_0 = arith.constant 0 : i32
    %c0_i32_1 = arith.constant 0 : i32
    return %c0_i32, %c0_i32_0 : i32, i32
  }
  func.func @transform_2(%arg0: i32) -> (i32, i32) {
    %c0_i32 = arith.constant 0 : i32
    %c0_i32_0 = arith.constant 0 : i32
    %c0_i32_1 = arith.constant 0 : i32
    return %c0_i32, %c0_i32_0 : i32, i32
  }
  func.func @transform_3(%arg0: i32) -> (i32, i32) {
    %c0_i32 = arith.constant 0 : i32
    %c0_i32_0 = arith.constant 0 : i32
    %c0_i32_1 = arith.constant 0 : i32
    return %c0_i32, %c0_i32_0 : i32, i32
  }
  func.func @transform_4(%arg0: i32) -> (i32, i32) {
    %c0_i32 = arith.constant 0 : i32
    %c0_i32_0 = arith.constant 0 : i32
    %c0_i32_1 = arith.constant 0 : i32
    return %c0_i32, %c0_i32_0 : i32, i32
  }
  func.func @transform_5(%arg0: i32) -> (i32, i32) {
    %c0_i32 = arith.constant 0 : i32
    %c0_i32_0 = arith.constant 0 : i32
    %c0_i32_1 = arith.constant 0 : i32
    return %c0_i32, %c0_i32_0 : i32, i32
  }
  func.func @transform_6(%arg0: i32) -> (i32, i32) {
    %c0_i32 = arith.constant 0 : i32
    %c0_i32_0 = arith.constant 0 : i32
    %c0_i32_1 = arith.constant 0 : i32
    return %c0_i32, %c0_i32_0 : i32, i32
  }
  func.func @transform_7(%arg0: i32) -> (i32, i32) {
    %c0_i32 = arith.constant 0 : i32
    %c0_i32_0 = arith.constant 0 : i32
    %c0_i32_1 = arith.constant 0 : i32
    return %c0_i32, %c0_i32_0 : i32, i32
  }
  func.func @transform_8(%arg0: i32) -> (i32, i32) {
    %c0_i32 = arith.constant 0 : i32
    %c0_i32_0 = arith.constant 0 : i32
    %c0_i32_1 = arith.constant 0 : i32
    return %c0_i32, %c0_i32_0 : i32, i32
  }
  func.func @transform_9(%arg0: i32) -> (i32, i32) {
    %c0_i32 = arith.constant 0 : i32
    %c0_i32_0 = arith.constant 0 : i32
    %c0_i32_1 = arith.constant 0 : i32
    return %c0_i32, %c0_i32_0 : i32, i32
  }
  func.func @transform_10(%arg0: i32) -> (i32, i32) {
    %c0_i32 = arith.constant 0 : i32
    %c0_i32_0 = arith.constant 0 : i32
    %c0_i32_1 = arith.constant 0 : i32
    return %c0_i32, %c0_i32_0 : i32, i32
  }
  func.func @transform_11(%arg0: i32) -> (i32, i32) {
    %c0_i32 = arith.constant 0 : i32
    %c0_i32_0 = arith.constant 0 : i32
    %c0_i32_1 = arith.constant 0 : i32
    return %c0_i32, %c0_i32_0 : i32, i32
  }
  func.func @transform_12(%arg0: i32) -> (i32, i32) {
    %c0_i32 = arith.constant 0 : i32
    %c0_i32_0 = arith.constant 0 : i32
    %c0_i32_1 = arith.constant 0 : i32
    return %c0_i32, %c0_i32_0 : i32, i32
  }
  func.func @transform_13(%arg0: i32) -> (i32, i32) {
    %c0_i32 = arith.constant 0 : i32
    %c0_i32_0 = arith.constant 0 : i32
    return %arg0, %c0_i32 : i32, i32
  }
}

</mosaic_0001>

<llo_original>
// kernel: tpu_custom_call.1
$region0: #{tpu_custom_call.1}
  #allocation0 [shape = 'u32[]', space=smem, size = 0x4, offset = 0x4, fixed_abs, tag = 'smem constant byte address 0x4 - core index']
  #allocation1 [shape = 'u32[144,128]{1,0:T(1,128)}', space=vmem, size = 0x12000, scoped, tag = 'internal scratch']
  %s0 = inlined_call_operand.vmem [shape: f32[48,33], index: 0, kind: input, shape index: {}]
  %s1 = inlined_call_operand.vmem [shape: bf16[33,256], index: 1, kind: input, shape index: {}]
  %s2 = inlined_call_operand.vmem [shape: f32[1,256], index: 2, kind: input, shape index: {}]
  %s3 = inlined_call_operand.vmem [shape: f32[1,256], index: 3, kind: input, shape index: {}]
  %s4 = inlined_call_operand.vmem [shape: f32[1,256], index: 4, kind: input, shape index: {}]
  %s5 = inlined_call_operand.hbm [shape: bf16[256,256], index: 5, kind: input, shape index: {}]
  %s6 = inlined_call_operand.vmem [shape: f32[1,256], index: 6, kind: input, shape index: {}]
  %s7 = inlined_call_operand.vmem [shape: f32[1,256], index: 7, kind: input, shape index: {}]
  %s8 = inlined_call_operand.vmem [shape: f32[1,256], index: 8, kind: input, shape index: {}]
  %s9 = inlined_call_operand.hbm [shape: bf16[256,128], index: 9, kind: input, shape index: {}]
  %s10 = inlined_call_operand.vmem [shape: f32[1,128], index: 10, kind: input, shape index: {}]
  %s11 = inlined_call_operand.vmem [shape: f32[1,128], index: 11, kind: input, shape index: {}]
  %s12 = inlined_call_operand.vmem [shape: f32[1,128], index: 12, kind: input, shape index: {}]
  %s13 = inlined_call_operand.vmem [shape: f32[48,8], index: 13, kind: output, shape index: {}]
  %s14 = sld [smem:[#allocation0]]
  $region93: #{tpu_custom_call.1} parent=0
    _
  %s16 = ssub.s32 1, %s14
  %s17 = scalar_select 0, %s16, %s14
  $region1: #{tpu_custom_call.1} parent=0
    #allocation2 [shape = 'u8[131072]{0}', space=vmem, size = 0x20000, scoped, tag = 'input window, operand 5, single buffered']
    #allocation3 [shape = 's32[2]{0}', space=sflag, size = 0x8, scoped, tag = 'scoped memory for tpu_custom_call.1']
    #allocation4 [shape = 'u8[65536]{0}', space=vmem, size = 0x10000, scoped, tag = 'input window, operand 9, single buffered']
    #allocation5 [shape = 's32[1]{0}', space=sflag, size = 0x4, scoped, tag = 'scoped memory for tpu_custom_call.1']
    %18 = vsyncpa [#allocation3], 0
    %19 = vsyncpa [#allocation5], 0
    loop: start=0, step=1, limit=4
    $region2: #{tpu_custom_call.1} parent=1 // loop_pre_header
      _
    $region3: #{tpu_custom_call.1} parent=1 // loop_header
      %s21 = sphi 0, %s25
      %p22 = scmp.ge.s32.totalorder %s21, 4
      %s31 = sphi 0, %s33
      %s34 = sphi 0, %s31
      %s35 = sphi 0, %s34
      %s51 = sphi 0, %s35
      %s55 = sphi 0, %s55
      %s57 = sphi 0, %s55
      %s58 = sphi 0, %s57
      %s72 = sphi 0, %s58
      %s76 = sphi 0, %s76
      %s78 = sphi 0, %s76
      %s79 = sphi 0, %s78
      %s93 = sphi 0, %s79
      %s97 = sphi 0, %s97
      %s99 = sphi 0, %s97
      %s100 = sphi 0, %s99
      %s114 = sphi 0, %s100
      %s118 = sphi 0, %s118
      %s120 = sphi 0, %s118
      %s121 = sphi 0, %s120
      %s135 = sphi 0, %s121
      %s139 = sphi 0, %s139
      %s141 = sphi 0, %s139
      %s142 = sphi 0, %s141
      %s156 = sphi 0, %s142
      %s160 = sphi 0, %s160
      %s162 = sphi 0, %s160
      %s163 = sphi 0, %s162
      %s177 = sphi 0, %s163
      %s181 = sphi 0, %s181
      %s183 = sphi 0, %s181
      %s184 = sphi 0, %s183
      %s198 = sphi 0, %s184
      %s202 = sphi 0, %s202
      %s204 = sphi 0, %s202
      %s205 = sphi 0, %s204
      %s219 = sphi 0, %s205
      %s223 = sphi 0, %s223
      %s225 = sphi 0, %s223
      %s226 = sphi 0, %s225
      %s240 = sphi 0, %s226
      %s244 = sphi 0, %s244
      %s246 = sphi 0, %s244
      %s247 = sphi 0, %s246
      %s261 = sphi 0, %s247
      %s265 = sphi 0, %s265
      %s267 = sphi 0, %s265
      %s268 = sphi 0, %s267
      %s282 = sphi 0, %s268
      %s286 = sphi 0, %s286
      %s288 = sphi 0, %s286
      %s289 = sphi 0, %s288
      %s303 = sphi 0, %s289
      %s309 = sphi 0, %s311
      %s312 = sphi 0, %s309
      %s313 = sphi 0, %s312
      %s329 = sphi 0, %s313
    $region4: #{tpu_custom_call.1} parent=1 // loop_header_branch
      %24 = sbr.rel (%p22) target = $region8
    $region5: #{tpu_custom_call.1} parent=1 // loop_body
      %s26 = ssub.s32 %s21, 1
      %s27 = ssub.s32 %s21, 2
      %s28 = sadd.s32 %s21, 1
      %s29 = ssub.s32 %s21, %s28
      %p30 = scmp.eq.s32.totalorder %s29, 0
      %s32 = sadd.s32 %s31, 1
      %s33 = scalar_select %p30, %s31, %s32
      %p36 = pneg %p30
      %p37 = scmp.eq.s32.totalorder %s21, 1
      %p38 = por %p36, %p37
      %p39 = scmp.ne.s32.totalorder %s31, %s34
      %p40 = scmp.eq.s32.totalorder %s21, 0
      %p41 = por %p39, %p40
      %p42 = scmp.ne.s32.totalorder %s31, %s34
      %p43 = scmp.eq.s32.totalorder %s26, 1
      %p44 = por %p42, %p43
      %p45 = scmp.ne.s32.totalorder %s34, %s35
      %p46 = scmp.eq.s32.totalorder %s26, 0
      %p47 = por %p45, %p46
      %p48 = scmp.ne.s32.totalorder %s34, %s35
      %p49 = scmp.eq.s32.totalorder %s27, 1
      %p50 = por %p48, %p49
      %p52 = scmp.ne.s32.totalorder %s35, %s51
      %p53 = scmp.eq.s32.totalorder %s27, 0
      %p54 = por %p52, %p53
      %s56 = sadd.s32 %s55, 1
      %p59 = scmp.eq.s32.totalorder %s21, 1
      %p60 = scmp.ne.s32.totalorder %s55, %s57
      %p61 = scmp.eq.s32.totalorder %s21, 0
      %p62 = por %p60, %p61
      %p63 = scmp.ne.s32.totalorder %s55, %s57
      %p64 = scmp.eq.s32.totalorder %s26, 1
      %p65 = por %p63, %p64
      %p66 = scmp.ne.s32.totalorder %s57, %s58
      %p67 = scmp.eq.s32.totalorder %s26, 0
      %p68 = por %p66, %p67
      %p69 = scmp.ne.s32.totalorder %s57, %s58
      %p70 = scmp.eq.s32.totalorder %s27, 1
      %p71 = por %p69, %p70
      %p73 = scmp.ne.s32.totalorder %s58, %s72
      %p74 = scmp.eq.s32.totalorder %s27, 0
      %p75 = por %p73, %p74
      %s77 = sadd.s32 %s76, 1
      %p80 = scmp.eq.s32.totalorder %s21, 1
      %p81 = scmp.ne.s32.totalorder %s76, %s78
      %p82 = scmp.eq.s32.totalorder %s21, 0
      %p83 = por %p81, %p82
      %p84 = scmp.ne.s32.totalorder %s76, %s78
      %p85 = scmp.eq.s32.totalorder %s26, 1
      %p86 = por %p84, %p85
      %p87 = scmp.ne.s32.totalorder %s78, %s79
      %p88 = scmp.eq.s32.totalorder %s26, 0
      %p89 = por %p87, %p88
      %p90 = scmp.ne.s32.totalorder %s78, %s79
      %p91 = scmp.eq.s32.totalorder %s27, 1
      %p92 = por %p90, %p91
      %p94 = scmp.ne.s32.totalorder %s79, %s93
      %p95 = scmp.eq.s32.totalorder %s27, 0
      %p96 = por %p94, %p95
      %s98 = sadd.s32 %s97, 1
      %p101 = scmp.eq.s32.totalorder %s21, 1
      %p102 = scmp.ne.s32.totalorder %s97, %s99
      %p103 = scmp.eq.s32.totalorder %s21, 0
      %p104 = por %p102, %p103
      %p105 = scmp.ne.s32.totalorder %s97, %s99
      %p106 = scmp.eq.s32.totalorder %s26, 1
      %p107 = por %p105, %p106
      %p108 = scmp.ne.s32.totalorder %s99, %s100
      %p109 = scmp.eq.s32.totalorder %s26, 0
      %p110 = por %p108, %p109
      %p111 = scmp.ne.s32.totalorder %s99, %s100
      %p112 = scmp.eq.s32.totalorder %s27, 1
      %p113 = por %p111, %p112
      %p115 = scmp.ne.s32.totalorder %s100, %s114
      %p116 = scmp.eq.s32.totalorder %s27, 0
      %p117 = por %p115, %p116
      %s119 = sadd.s32 %s118, 1
      %p122 = scmp.eq.s32.totalorder %s21, 1
      %p123 = scmp.ne.s32.totalorder %s118, %s120
      %p124 = scmp.eq.s32.totalorder %s21, 0
      %p125 = por %p123, %p124
      %p126 = scmp.ne.s32.totalorder %s118, %s120
      %p127 = scmp.eq.s32.totalorder %s26, 1
      %p128 = por %p126, %p127
      %p129 = scmp.ne.s32.totalorder %s120, %s121
      %p130 = scmp.eq.s32.totalorder %s26, 0
      %p131 = por %p129, %p130
      %p132 = scmp.ne.s32.totalorder %s120, %s121
      %p133 = scmp.eq.s32.totalorder %s27, 1
      %p134 = por %p132, %p133
      %p136 = scmp.ne.s32.totalorder %s121, %s135
      %p137 = scmp.eq.s32.totalorder %s27, 0
      %p138 = por %p136, %p137
      %s140 = sadd.s32 %s139, 1
      %p143 = scmp.eq.s32.totalorder %s21, 1
      %p144 = scmp.ne.s32.totalorder %s139, %s141
      %p145 = scmp.eq.s32.totalorder %s21, 0
      %p146 = por %p144, %p145
      %p147 = scmp.ne.s32.totalorder %s139, %s141
      %p148 = scmp.eq.s32.totalorder %s26, 1
      %p149 = por %p147, %p148
      %p150 = scmp.ne.s32.totalorder %s141, %s142
      %p151 = scmp.eq.s32.totalorder %s26, 0
      %p152 = por %p150, %p151
      %p153 = scmp.ne.s32.totalorder %s141, %s142
      %p154 = scmp.eq.s32.totalorder %s27, 1
      %p155 = por %p153, %p154
      %p157 = scmp.ne.s32.totalorder %s142, %s156
      %p158 = scmp.eq.s32.totalorder %s27, 0
      %p159 = por %p157, %p158
      %s161 = sadd.s32 %s160, 1
      %p164 = scmp.eq.s32.totalorder %s21, 1
      %p165 = scmp.ne.s32.totalorder %s160, %s162
      %p166 = scmp.eq.s32.totalorder %s21, 0
      %p167 = por %p165, %p166
      %p168 = scmp.ne.s32.totalorder %s160, %s162
      %p169 = scmp.eq.s32.totalorder %s26, 1
      %p170 = por %p168, %p169
      %p171 = scmp.ne.s32.totalorder %s162, %s163
      %p172 = scmp.eq.s32.totalorder %s26, 0
      %p173 = por %p171, %p172
      %p174 = scmp.ne.s32.totalorder %s162, %s163
      %p175 = scmp.eq.s32.totalorder %s27, 1
      %p176 = por %p174, %p175
      %p178 = scmp.ne.s32.totalorder %s163, %s177
      %p179 = scmp.eq.s32.totalorder %s27, 0
      %p180 = por %p178, %p179
      %s182 = sadd.s32 %s181, 1
      %p185 = scmp.eq.s32.totalorder %s21, 1
      %p186 = scmp.ne.s32.totalorder %s181, %s183
      %p187 = scmp.eq.s32.totalorder %s21, 0
      %p188 = por %p186, %p187
      %p189 = scmp.ne.s32.totalorder %s181, %s183
      %p190 = scmp.eq.s32.totalorder %s26, 1
      %p191 = por %p189, %p190
      %p192 = scmp.ne.s32.totalorder %s183, %s184
      %p193 = scmp.eq.s32.totalorder %s26, 0
      %p194 = por %p192, %p193
      %p195 = scmp.ne.s32.totalorder %s183, %s184
      %p196 = scmp.eq.s32.totalorder %s27, 1
      %p197 = por %p195, %p196
      %p199 = scmp.ne.s32.totalorder %s184, %s198
      %p200 = scmp.eq.s32.totalorder %s27, 0
      %p201 = por %p199, %p200
      %s203 = sadd.s32 %s202, 1
      %p206 = scmp.eq.s32.totalorder %s21, 1
      %p207 = scmp.ne.s32.totalorder %s202, %s204
      %p208 = scmp.eq.s32.totalorder %s21, 0
      %p209 = por %p207, %p208
      %p210 = scmp.ne.s32.totalorder %s202, %s204
      %p211 = scmp.eq.s32.totalorder %s26, 1
      %p212 = por %p210, %p211
      %p213 = scmp.ne.s32.totalorder %s204, %s205
      %p214 = scmp.eq.s32.totalorder %s26, 0
      %p215 = por %p213, %p214
      %p216 = scmp.ne.s32.totalorder %s204, %s205
      %p217 = scmp.eq.s32.totalorder %s27, 1
      %p218 = por %p216, %p217
      %p220 = scmp.ne.s32.totalorder %s205, %s219
      %p221 = scmp.eq.s32.totalorder %s27, 0
      %p222 = por %p220, %p221
      %s224 = sadd.s32 %s223, 1
      %p227 = scmp.eq.s32.totalorder %s21, 1
      %p228 = scmp.ne.s32.totalorder %s223, %s225
      %p229 = scmp.eq.s32.totalorder %s21, 0
      %p230 = por %p228, %p229
      %p231 = scmp.ne.s32.totalorder %s223, %s225
      %p232 = scmp.eq.s32.totalorder %s26, 1
      %p233 = por %p231, %p232
      %p234 = scmp.ne.s32.totalorder %s225, %s226
      %p235 = scmp.eq.s32.totalorder %s26, 0
      %p236 = por %p234, %p235
      %p237 = scmp.ne.s32.totalorder %s225, %s226
      %p238 = scmp.eq.s32.totalorder %s27, 1
      %p239 = por %p237, %p238
      %p241 = scmp.ne.s32.totalorder %s226, %s240
      %p242 = scmp.eq.s32.totalorder %s27, 0
      %p243 = por %p241, %p242
      %s245 = sadd.s32 %s244, 1
      %p248 = scmp.eq.s32.totalorder %s21, 1
      %p249 = scmp.ne.s32.totalorder %s244, %s246
      %p250 = scmp.eq.s32.totalorder %s21, 0
      %p251 = por %p249, %p250
      %p252 = scmp.ne.s32.totalorder %s244, %s246
      %p253 = scmp.eq.s32.totalorder %s26, 1
      %p254 = por %p252, %p253
      %p255 = scmp.ne.s32.totalorder %s246, %s247
      %p256 = scmp.eq.s32.totalorder %s26, 0
      %p257 = por %p255, %p256
      %p258 = scmp.ne.s32.totalorder %s246, %s247
      %p259 = scmp.eq.s32.totalorder %s27, 1
      %p260 = por %p258, %p259
      %p262 = scmp.ne.s32.totalorder %s247, %s261
      %p263 = scmp.eq.s32.totalorder %s27, 0
      %p264 = por %p262, %p263
      %s266 = sadd.s32 %s265, 1
      %p269 = scmp.eq.s32.totalorder %s21, 1
      %p270 = scmp.ne.s32.totalorder %s265, %s267
      %p271 = scmp.eq.s32.totalorder %s21, 0
      %p272 = por %p270, %p271
      %p273 = scmp.ne.s32.totalorder %s265, %s267
      %p274 = scmp.eq.s32.totalorder %s26, 1
      %p275 = por %p273, %p274
      %p276 = scmp.ne.s32.totalorder %s267, %s268
      %p277 = scmp.eq.s32.totalorder %s26, 0
      %p278 = por %p276, %p277
      %p279 = scmp.ne.s32.totalorder %s267, %s268
      %p280 = scmp.eq.s32.totalorder %s27, 1
      %p281 = por %p279, %p280
      %p283 = scmp.ne.s32.totalorder %s268, %s282
      %p284 = scmp.eq.s32.totalorder %s27, 0
      %p285 = por %p283, %p284
      %s287 = sadd.s32 %s286, 1
      %p290 = scmp.eq.s32.totalorder %s21, 1
      %p291 = scmp.ne.s32.totalorder %s286, %s288
      %p292 = scmp.eq.s32.totalorder %s21, 0
      %p293 = por %p291, %p292
      %p294 = scmp.ne.s32.totalorder %s286, %s288
      %p295 = scmp.eq.s32.totalorder %s26, 1
      %p296 = por %p294, %p295
      %p297 = scmp.ne.s32.totalorder %s288, %s289
      %p298 = scmp.eq.s32.totalorder %s26, 0
      %p299 = por %p297, %p298
      %p300 = scmp.ne.s32.totalorder %s288, %s289
      %p301 = scmp.eq.s32.totalorder %s27, 1
      %p302 = por %p300, %p301
      %p304 = scmp.ne.s32.totalorder %s289, %s303
      %p305 = scmp.eq.s32.totalorder %s27, 0
      %p306 = por %p304, %p305
      %s307 = ssub.s32 %s21, %s28
      %p308 = scmp.eq.s32.totalorder %s307, 0
      %s310 = sadd.s32 %s309, 1
      %s311 = scalar_select %p308, %s309, %s310
      %p314 = pneg %p308
      %p315 = scmp.eq.s32.totalorder %s21, 1
      %p316 = por %p314, %p315
      %p317 = scmp.ne.s32.totalorder %s309, %s312
      %p318 = scmp.eq.s32.totalorder %s21, 0
      %p319 = por %p317, %p318
      %p320 = scmp.ne.s32.totalorder %s309, %s312
      %p321 = scmp.eq.s32.totalorder %s26, 1
      %p322 = por %p320, %p321
      %p323 = scmp.ne.s32.totalorder %s312, %s313
      %p324 = scmp.eq.s32.totalorder %s26, 0
      %p325 = por %p323, %p324
      %p326 = scmp.ne.s32.totalorder %s312, %s313
      %p327 = scmp.eq.s32.totalorder %s27, 1
      %p328 = por %p326, %p327
      %p330 = scmp.ne.s32.totalorder %s313, %s329
      %p331 = scmp.eq.s32.totalorder %s27, 0
      %p332 = por %p330, %p331
      %p333 = scmp.le.s32.totalorder 1, %s21
      %p334 = scmp.lt.s32.totalorder %s21, 3
      %p335 = pnand %p333, %p334
      %p336 = pneg %p335
      // Predicated region
      $region9: #{tpu_custom_call.1} parent=5 // pred_check
        _
      $region10: #{tpu_custom_call.1} parent=5 // pred_check_branch
        %338 = sbr.rel (%p335) target = $region12
      $region11: #{tpu_custom_call.1} parent=5 // pred_region
        %s339 = ssub.s32 %s21, 1
        // Predicated region
        $region13: #{tpu_custom_call.1} parent=11 // pred_check
          %p340 = pneg %p68
        $region14: #{tpu_custom_call.1} parent=11 // pred_check_branch
          %342 = sbr.rel (%p340) target = $region16
        $region15: #{tpu_custom_call.1} parent=11 // pred_region
          _
        $region16: #{tpu_custom_call.1} parent=11 // pred_fallthru
          _
        // Predicated region
        $region17: #{tpu_custom_call.1} parent=11 // pred_check
          %p343 = pneg %p89
        $region18: #{tpu_custom_call.1} parent=11 // pred_check_branch
          %345 = sbr.rel (%p343) target = $region20
        $region19: #{tpu_custom_call.1} parent=11 // pred_region
          _
        $region20: #{tpu_custom_call.1} parent=11 // pred_fallthru
          _
        // Predicated region
        $region21: #{tpu_custom_call.1} parent=11 // pred_check
          %p346 = pneg %p110
        $region22: #{tpu_custom_call.1} parent=11 // pred_check_branch
          %348 = sbr.rel (%p346) target = $region24
        $region23: #{tpu_custom_call.1} parent=11 // pred_region
          _
        $region24: #{tpu_custom_call.1} parent=11 // pred_fallthru
          _
        // Predicated region
        $region25: #{tpu_custom_call.1} parent=11 // pred_check
          %p349 = pneg %p131
        $region26: #{tpu_custom_call.1} parent=11 // pred_check_branch
          %351 = sbr.rel (%p349) target = $region28
        $region27: #{tpu_custom_call.1} parent=11 // pred_region
          _
        $region28: #{tpu_custom_call.1} parent=11 // pred_fallthru
          _
        // Predicated region
        $region29: #{tpu_custom_call.1} parent=11 // pred_check
          %p352 = pneg %p152
        $region30: #{tpu_custom_call.1} parent=11 // pred_check_branch
          %354 = sbr.rel (%p352) target = $region32
        $region31: #{tpu_custom_call.1} parent=11 // pred_region
          %s356 = ssub.s32 4096, 4096
          %357 = vsyncadd [#allocation3], %s356
          %s358 = sshll.u32 [#allocation2], 4
          %s359 = int_to_ptr.vmem [resolvable:$true] %s358
          %364 = dma.hbm_to_vmem [thread:$0]  %s5, 4096, %s359, [#allocation3], 128, 128, 8
        $region32: #{tpu_custom_call.1} parent=11 // pred_fallthru
          _
        // Predicated region
        $region33: #{tpu_custom_call.1} parent=11 // pred_check
          %p365 = pneg %p173
        $region34: #{tpu_custom_call.1} parent=11 // pred_check_branch
          %367 = sbr.rel (%p365) target = $region36
        $region35: #{tpu_custom_call.1} parent=11 // pred_region
          _
        $region36: #{tpu_custom_call.1} parent=11 // pred_fallthru
          _
        // Predicated region
        $region37: #{tpu_custom_call.1} parent=11 // pred_check
          %p368 = pneg %p194
        $region38: #{tpu_custom_call.1} parent=11 // pred_check_branch
          %370 = sbr.rel (%p368) target = $region40
        $region39: #{tpu_custom_call.1} parent=11 // pred_region
          _
        $region40: #{tpu_custom_call.1} parent=11 // pred_fallthru
          _
        // Predicated region
        $region41: #{tpu_custom_call.1} parent=11 // pred_check
          %p371 = pneg %p215
        $region42: #{tpu_custom_call.1} parent=11 // pred_check_branch
          %373 = sbr.rel (%p371) target = $region44
        $region43: #{tpu_custom_call.1} parent=11 // pred_region
          _
        $region44: #{tpu_custom_call.1} parent=11 // pred_fallthru
          _
        // Predicated region
        $region45: #{tpu_custom_call.1} parent=11 // pred_check
          %p374 = pneg %p236
        $region46: #{tpu_custom_call.1} parent=11 // pred_check_branch
          %376 = sbr.rel (%p374) target = $region48
        $region47: #{tpu_custom_call.1} parent=11 // pred_region
          %s378 = ssub.s32 2048, 2048
          %379 = vsyncadd [#allocation5], %s378
          %s380 = sshll.u32 [#allocation4], 4
          %s381 = int_to_ptr.vmem [resolvable:$true] %s380
          %386 = dma.hbm_to_vmem [thread:$0]  %s9, 2048, %s381, [#allocation5], 64, 64, 4
        $region48: #{tpu_custom_call.1} parent=11 // pred_fallthru
          _
        // Predicated region
        $region49: #{tpu_custom_call.1} parent=11 // pred_check
          %p387 = pneg %p257
        $region50: #{tpu_custom_call.1} parent=11 // pred_check_branch
          %389 = sbr.rel (%p387) target = $region52
        $region51: #{tpu_custom_call.1} parent=11 // pred_region
          _
        $region52: #{tpu_custom_call.1} parent=11 // pred_fallthru
          _
        // Predicated region
        $region53: #{tpu_custom_call.1} parent=11 // pred_check
          %p390 = pneg %p278
        $region54: #{tpu_custom_call.1} parent=11 // pred_check_branch
          %392 = sbr.rel (%p390) target = $region56
        $region55: #{tpu_custom_call.1} parent=11 // pred_region
          _
        $region56: #{tpu_custom_call.1} parent=11 // pred_fallthru
          _
        // Predicated region
        $region57: #{tpu_custom_call.1} parent=11 // pred_check
          %p393 = pneg %p299
        $region58: #{tpu_custom_call.1} parent=11 // pred_check_branch
          %395 = sbr.rel (%p393) target = $region60
        $region59: #{tpu_custom_call.1} parent=11 // pred_region
          _
        $region60: #{tpu_custom_call.1} parent=11 // pred_fallthru
          _
      $region12: #{tpu_custom_call.1} parent=5 // pred_fallthru
        _
      %p396 = scmp.lt.s32.totalorder %s21, 2
      // Predicated region
      $region61: #{tpu_custom_call.1} parent=5 // pred_check
        %p397 = pneg %p396
      $region62: #{tpu_custom_call.1} parent=5 // pred_check_branch
        %399 = sbr.rel (%p397) target = $region64
      $region63: #{tpu_custom_call.1} parent=5 // pred_region
        // Predicated region
        $region65: #{tpu_custom_call.1} parent=63 // pred_check
          %p400 = pneg %p41
        $region66: #{tpu_custom_call.1} parent=63 // pred_check_branch
          %402 = sbr.rel (%p400) target = $region68
        $region67: #{tpu_custom_call.1} parent=63 // pred_region
          %s403 = smul.u32 3, %s21
          %p404 = scmp.lt.s32.totalorder %s403, 5
          %s405 = scalar_select %p404, %s403, 5
          %s406 = smul.addr %s405, 8
          %s407 = scalar_lea.vmem %s0, %s406
          %s408 = smul.u32 3, %s21
        $region68: #{tpu_custom_call.1} parent=63 // pred_fallthru
          _
      $region64: #{tpu_custom_call.1} parent=5 // pred_fallthru
        _
      %p409 = scmp.le.s32.totalorder 1, %s21
      %p410 = scmp.lt.s32.totalorder %s21, 3
      %p411 = pnand %p409, %p410
      %p412 = pneg %p411
      // Predicated region
      $region69: #{tpu_custom_call.1} parent=5 // pred_check
        _
      $region70: #{tpu_custom_call.1} parent=5 // pred_check_branch
        %414 = sbr.rel (%p411) target = $region72
      $region71: #{tpu_custom_call.1} parent=5 // pred_region
        %s415 = ssub.s32 %s21, 1
        // Predicated region
        $region73: #{tpu_custom_call.1} parent=71 // pred_check
          %p416 = pneg %p152
        $region74: #{tpu_custom_call.1} parent=71 // pred_check_branch
          %418 = sbr.rel (%p416) target = $region76
        $region75: #{tpu_custom_call.1} parent=71 // pred_region
          %419 = dma.done [#allocation3], 4096
        $region76: #{tpu_custom_call.1} parent=71 // pred_fallthru
          _
        // Predicated region
        $region77: #{tpu_custom_call.1} parent=71 // pred_check
          %p420 = pneg %p236
        $region78: #{tpu_custom_call.1} parent=71 // pred_check_branch
          %422 = sbr.rel (%p420) target = $region80
        $region79: #{tpu_custom_call.1} parent=71 // pred_region
          %423 = dma.done [#allocation5], 2048
        $region80: #{tpu_custom_call.1} parent=71 // pred_fallthru
          _
        %s424 = smul.u32 3, %s26
        %p425 = scmp.lt.s32.totalorder %s424, 5
        %s426 = scalar_select %p425, %s424, 5
        %s427 = smul.addr %s426, 8
        %s428 = scalar_lea.vmem %s0, %s427
        %p429 = pneg %p47
        %p430 = pneg %p44
        %p431 = pneg %p68
        %p432 = pneg %p65
        %p433 = pneg %p89
        %p434 = pneg %p86
        %p435 = pneg %p110
        %p436 = pneg %p107
        %p437 = pneg %p131
        %p438 = pneg %p128
        %p439 = pneg %p152
        %p440 = pneg %p149
        %p441 = pneg %p173
        %p442 = pneg %p170
        %p443 = pneg %p194
        %p444 = pneg %p191
        %p445 = pneg %p215
        %p446 = pneg %p212
        %p447 = pneg %p236
        %p448 = pneg %p233
        %p449 = pneg %p257
        %p450 = pneg %p254
        %p451 = pneg %p278
        %p452 = pneg %p275
        %p453 = pneg %p299
        %p454 = pneg %p296
        %p455 = pneg %p325
        %p456 = pneg %p322
        %s457 = smul.u32 3, %s26
        %p458 = scmp.lt.s32.totalorder %s457, 5
        %s459 = scalar_select %p458, %s457, 5
        %s460 = smul.addr %s459, 8
        %s461 = scalar_lea.vmem %s13, %s460
        %s462 = smul.u32 3, %s26
        %p463 = scmp.lt.s32.totalorder %s462, 5
        %s464 = scalar_select %p463, %s462, 5
        %s465 = smul.addr %s464, 8
        %s466 = scalar_lea.vmem %s0, %s465
        %s467 = smul.u32 3, %s26
        %s468 = smul.u32 3, %s26
        %p469 = scmp.lt.s32.totalorder %s468, 5
        %s470 = scalar_select %p469, %s468, 5
        %s471 = smul.addr %s470, 8
        %s472 = scalar_lea.vmem %s13, %s471
        %s473 = smul.u32 3, %s26
        %v475 = vld [vmem:[%s466] sm:$0xff]
        %v476 = vld [vmem:[%s466 + $0x8] sm:$0xff]
        %v477 = vld [vmem:[%s466 + $0x10] sm:$0xff]
        %v478 = vpack.c.bf16 %v476, %v475
        %v479 = vpack.c.bf16 %v477, %v477
        %v480 = vld [vmem:[%s1] sm:$0xff]
        %v481 = vld [vmem:[%s1 + $0x8] sm:$0xff]
        %v482 = vld [vmem:[%s1 + $0x10] sm:$0xff]
        %v483 = vld [vmem:[%s1 + $0x18] sm:$0xff]
        %v484 = vld [vmem:[%s1 + $0x20] sm:$0x11]
        %v485 = vld [vmem:[%s2] sm:$0x3]
        %v487 = vlaneseq
        %v488 = vshrl.u32 %v487, 7
        %v489 = vsub.s32 0, %v488
        %v490 = vrot.slane %v485, %v489
        %v491 = vlaneseq
        %v492 = vshrl.u32 %v491, 7
        %v493 = vsub.s32 1, %v492
        %v494 = vrot.slane %v485, %v493
        %v502 = vunpack.c.l.b16 %v480
        %v503 = vunpack.c.h.b16 %v480
        %v504 = vunpack.c.l.b16 %v481
        %v505 = vunpack.c.h.b16 %v481
        %v506 = vunpack.c.l.b16 %v482
        %v507 = vunpack.c.h.b16 %v482
        %v508 = vunpack.c.l.b16 %v483
        %v509 = vunpack.c.h.b16 %v483
        %v510 = vunpack.c.l.b16 %v484
        %v511 = vunpack.c.h.b16 %v484
        %v512 = vpack.c.b16 %v504, %v502
        %v513 = vpack.c.b16 %v505, %v503
        %v514 = vpack.c.b16 %v508, %v506
        %v515 = vpack.c.b16 %v509, %v507
        %v516 = vpack.c.b16 %v510, %v510
        %v517 = vpack.c.b16 %v511, %v511
        %vm522 = vcmask 269312
        %v524 = vsel %vm522, %v478, 0
        %v527 = vsel %vm522, %v479, 0
        %vm529 = vcmask 1040384
        %v530 = vsel 0, 4294967295, 65535
        %v531 = vsel %vm529, %v530, 0
        %v533 = vand.u32 %v516, %v531
        %v536 = vand.u32 %v517, %v531
        %538 = vmatprep.subr.bf16.mxu0 %v513
        %539 = vmatpush1.bf16.msra.mxu0 %v512
        %540 = vmatprep.subr.bf16.mxu0 %v515
        %541 = vmatpush1.bf16.msra.mxu0 %v514
        %542 = vmatprep.subr.bf16.mxu0 %v536
        %543 = vmatpush1.bf16.msra.mxu0 %v533
        %544 = vmatprep.subr.bf16.mxu0 0
        %545 = vmatpush1.bf16.msra.mxu0 0
        %546 = vmatprep.subr.bf16.mxu0 0
        %547 = vmatpush1.bf16.msra.mxu0 0
        %548 = vmatprep.subr.bf16.mxu0 0
        %549 = vmatpush1.bf16.msra.mxu0 0
        %550 = vmatprep.subr.bf16.mxu0 0
        %551 = vmatpush1.bf16.msra.mxu0 0
        %552 = vmatprep.subr.bf16.mxu0 0
        %553 = vmatpush1.bf16.msra.mxu0 0
        %554 = vmatprep.subr.bf16.mxu0 0
        %555 = vmatpush1.bf16.msra.mxu0 0
        %556 = vmatprep.subr.bf16.mxu0 0
        %557 = vmatpush1.bf16.msra.mxu0 0
        %558 = vmatprep.subr.bf16.mxu0 0
        %559 = vmatpush1.bf16.msra.mxu0 0
        %560 = vmatprep.subr.bf16.mxu0 0
        %561 = vmatpush1.bf16.msra.mxu0 0
        %562 = vmatprep.subr.bf16.mxu0 0
        %563 = vmatpush1.bf16.msra.mxu0 0
        %564 = vmatprep.subr.bf16.mxu0 0
        %565 = vmatpush1.bf16.msra.mxu0 0
        %566 = vmatprep.subr.bf16.mxu0 0
        %567 = vmatpush1.bf16.msra.mxu0 0
        %568 = vmatprep.subr.bf16.mxu0 0
        %569 = vmatpush1.bf16.msra.mxu0 0
        %570 = vmatprep.mubr.bf16.mxu0 0
        %571 = vmatmul.mubr.bf16.gmra.mrb[0].mxu0 %v524
        %v572 = vpop.f32.mrb[0].mxu0
        %v573 = vadd.f32 %v490, %v572
        %v574 = vpop.f32.mrb[0].mxu0
        %v575 = vadd.f32 %v494, %v574
        %v576 = vpop.f32.mrb[0].mxu0
        %v577 = vadd.f32 %v490, %v576
        %v578 = vpop.f32.mrb[0].mxu0
        %v579 = vadd.f32 %v494, %v578
        %580 = vmatprep.mubr.bf16.mxu0 0
        %581 = vmatmul.mubr.bf16.gmra.mrb[0].mxu0 %v527
        %v582 = vpop.f32.mrb[0].mxu0
        %v583 = vadd.f32 %v490, %v582
        %v584 = vpop.f32.mrb[0].mxu0
        %v585 = vadd.f32 %v494, %v584
        %v586 = vpop.f32.mrb[0].mxu0
        %v587 = vpop.f32.mrb[0].mxu0
        %588 = vdwg.mxu0
        %v589 = vld [vmem:[%s3] sm:$0x3]
        %v590 = vld [vmem:[%s4] sm:$0x3]
        %v591 = vadd.f32 %v573, %v575
        %592 = vadd.xlane.f32.xlu0 %v591
        %v593 = vpop.xlane.xlu0 %592
        %v594 = vadd.f32 %v577, %v579
        %595 = vadd.xlane.f32.xlu0 %v594
        %v596 = vpop.xlane.xlu0 %595
        %v597 = vadd.f32 %v583, %v585
        %598 = vadd.xlane.f32.xlu0 %v597
        %v599 = vpop.xlane.xlu0 %598
        %v600 = vrcp.pop 256.0
        %v601 = vmul.f32 %v593, %v600
        %v602 = vmul.f32 %v596, %v600
        %v603 = vmul.f32 %v599, %v600
        %v604 = vsub.f32 %v573, %v601
        %v605 = vsub.f32 %v575, %v601
        %v606 = vsub.f32 %v577, %v602
        %v607 = vsub.f32 %v579, %v602
        %v608 = vsub.f32 %v583, %v603
        %v609 = vsub.f32 %v585, %v603
        %v610 = vmul.f32 %v604, %v604
        %v611 = vmul.f32 %v605, %v605
        %v612 = vmul.f32 %v606, %v606
        %v613 = vmul.f32 %v607, %v607
        %v614 = vmul.f32 %v608, %v608
        %v615 = vmul.f32 %v609, %v609
        %v616 = vadd.f32 %v610, %v611
        %617 = vadd.xlane.f32.xlu0 %v616
        %v618 = vpop.xlane.xlu0 %617
        %v619 = vadd.f32 %v612, %v613
        %620 = vadd.xlane.f32.xlu0 %v619
        %v621 = vpop.xlane.xlu0 %620
        %v622 = vadd.f32 %v614, %v615
        %623 = vadd.xlane.f32.xlu0 %v622
        %v624 = vpop.xlane.xlu0 %623
        %v625 = vmul.f32 %v618, %v600
        %v626 = vmul.f32 %v621, %v600
        %v627 = vmul.f32 %v624, %v600
        %v628 = vadd.f32 %v625, 1e-05
        %v629 = vadd.f32 %v626, 1e-05
        %v630 = vadd.f32 %v627, 1e-05
        %v631 = vrsqrt.pop %v628
        %v632 = vrsqrt.pop %v629
        %v633 = vrsqrt.pop %v630
        %v634 = vmul.f32 %v604, %v631
        %v635 = vmul.f32 %v605, %v631
        %v636 = vmul.f32 %v606, %v632
        %v637 = vmul.f32 %v607, %v632
        %v638 = vmul.f32 %v608, %v633
        %v639 = vmul.f32 %v609, %v633
        %v641 = vlaneseq
        %v642 = vshrl.u32 %v641, 7
        %v643 = vsub.s32 0, %v642
        %v644 = vrot.slane %v589, %v643
        %v645 = vlaneseq
        %v646 = vshrl.u32 %v645, 7
        %v647 = vsub.s32 1, %v646
        %v648 = vrot.slane %v589, %v647
        %v651 = vmul.f32 %v634, %v644
        %v652 = vmul.f32 %v635, %v648
        %v653 = vmul.f32 %v636, %v644
        %v654 = vmul.f32 %v637, %v648
        %v655 = vmul.f32 %v638, %v644
        %v656 = vmul.f32 %v639, %v648
        %v658 = vlaneseq
        %v659 = vshrl.u32 %v658, 7
        %v660 = vsub.s32 0, %v659
        %v661 = vrot.slane %v590, %v660
        %v662 = vlaneseq
        %v663 = vshrl.u32 %v662, 7
        %v664 = vsub.s32 1, %v663
        %v665 = vrot.slane %v590, %v664
        %v668 = vadd.f32 %v651, %v661
        %v669 = vadd.f32 %v652, %v665
        %v670 = vadd.f32 %v653, %v661
        %v671 = vadd.f32 %v654, %v665
        %v672 = vadd.f32 %v655, %v661
        %v673 = vadd.f32 %v656, %v665
        %v674 = vmax.f32 %v668, 0.0
        %v675 = vmax.f32 %v669, 0.0
        %v676 = vmax.f32 %v670, 0.0
        %v677 = vmax.f32 %v671, 0.0
        %v678 = vmax.f32 %v672, 0.0
        %v679 = vmax.f32 %v673, 0.0
        %v680 = vpack.c.bf16 %v676, %v674
        %v681 = vpack.c.bf16 %v677, %v675
        %v682 = vpack.c.bf16 %v678, %v678
        %v683 = vpack.c.bf16 %v679, %v679
        %v684 = vld [vmem:[#allocation2] sm:$0xff]
        %v685 = vld [vmem:[#allocation2 + $0x8] sm:$0xff]
        %v686 = vld [vmem:[#allocation2 + $0x10] sm:$0xff]
        %v687 = vld [vmem:[#allocation2 + $0x18] sm:$0xff]
        %v688 = vld [vmem:[#allocation2 + $0x20] sm:$0xff]
        %v689 = vld [vmem:[#allocation2 + $0x28] sm:$0xff]
        %v690 = vld [vmem:[#allocation2 + $0x30] sm:$0xff]
        %v691 = vld [vmem:[#allocation2 + $0x38] sm:$0xff]
        %v692 = vld [vmem:[#allocation2 + $0x40] sm:$0xff]
        %v693 = vld [vmem:[#allocation2 + $0x48] sm:$0xff]
        %v694 = vld [vmem:[#allocation2 + $0x50] sm:$0xff]
        %v695 = vld [vmem:[#allocation2 + $0x58] sm:$0xff]
        %v696 = vld [vmem:[#allocation2 + $0x60] sm:$0xff]
        %v697 = vld [vmem:[#allocation2 + $0x68] sm:$0xff]
        %v698 = vld [vmem:[#allocation2 + $0x70] sm:$0xff]
        %v699 = vld [vmem:[#allocation2 + $0x78] sm:$0xff]
        %v700 = vld [vmem:[#allocation2 + $0x80] sm:$0xff]
        %v701 = vld [vmem:[#allocation2 + $0x88] sm:$0xff]
        %v702 = vld [vmem:[#allocation2 + $0x90] sm:$0xff]
        %v703 = vld [vmem:[#allocation2 + $0x98] sm:$0xff]
        %v704 = vld [vmem:[#allocation2 + $0xa0] sm:$0xff]
        %v705 = vld [vmem:[#allocation2 + $0xa8] sm:$0xff]
        %v706 = vld [vmem:[#allocation2 + $0xb0] sm:$0xff]
        %v707 = vld [vmem:[#allocation2 + $0xb8] sm:$0xff]
        %v708 = vld [vmem:[#allocation2 + $0xc0] sm:$0xff]
        %v709 = vld [vmem:[#allocation2 + $0xc8] sm:$0xff]
        %v710 = vld [vmem:[#allocation2 + $0xd0] sm:$0xff]
        %v711 = vld [vmem:[#allocation2 + $0xd8] sm:$0xff]
        %v712 = vld [vmem:[#allocation2 + $0xe0] sm:$0xff]
        %v713 = vld [vmem:[#allocation2 + $0xe8] sm:$0xff]
        %v714 = vld [vmem:[#allocation2 + $0xf0] sm:$0xff]
        %v715 = vld [vmem:[#allocation2 + $0xf8] sm:$0xff]
        %v716 = vld [vmem:[%s6] sm:$0x3]
        %v718 = vlaneseq
        %v719 = vshrl.u32 %v718, 7
        %v720 = vsub.s32 0, %v719
        %v721 = vrot.slane %v716, %v720
        %v722 = vlaneseq
        %v723 = vshrl.u32 %v722, 7
        %v724 = vsub.s32 1, %v723
        %v725 = vrot.slane %v716, %v724
        %v760 = vunpack.c.l.b16 %v684
        %v761 = vunpack.c.h.b16 %v684
        %v762 = vunpack.c.l.b16 %v685
        %v763 = vunpack.c.h.b16 %v685
        %v764 = vunpack.c.l.b16 %v686
        %v765 = vunpack.c.h.b16 %v686
        %v766 = vunpack.c.l.b16 %v687
        %v767 = vunpack.c.h.b16 %v687
        %v768 = vunpack.c.l.b16 %v688
        %v769 = vunpack.c.h.b16 %v688
        %v770 = vunpack.c.l.b16 %v689
        %v771 = vunpack.c.h.b16 %v689
        %v772 = vunpack.c.l.b16 %v690
        %v773 = vunpack.c.h.b16 %v690
        %v774 = vunpack.c.l.b16 %v691
        %v775 = vunpack.c.h.b16 %v691
        %v776 = vunpack.c.l.b16 %v692
        %v777 = vunpack.c.h.b16 %v692
        %v778 = vunpack.c.l.b16 %v693
        %v779 = vunpack.c.h.b16 %v693
        %v780 = vunpack.c.l.b16 %v694
        %v781 = vunpack.c.h.b16 %v694
        %v782 = vunpack.c.l.b16 %v695
        %v783 = vunpack.c.h.b16 %v695
        %v784 = vunpack.c.l.b16 %v696
        %v785 = vunpack.c.h.b16 %v696
        %v786 = vunpack.c.l.b16 %v697
        %v787 = vunpack.c.h.b16 %v697
        %v788 = vunpack.c.l.b16 %v698
        %v789 = vunpack.c.h.b16 %v698
        %v790 = vunpack.c.l.b16 %v699
        %v791 = vunpack.c.h.b16 %v699
        %v792 = vunpack.c.l.b16 %v700
        %v793 = vunpack.c.h.b16 %v700
        %v794 = vunpack.c.l.b16 %v701
        %v795 = vunpack.c.h.b16 %v701
        %v796 = vunpack.c.l.b16 %v702
        %v797 = vunpack.c.h.b16 %v702
        %v798 = vunpack.c.l.b16 %v703
        %v799 = vunpack.c.h.b16 %v703
        %v800 = vunpack.c.l.b16 %v704
        %v801 = vunpack.c.h.b16 %v704
        %v802 = vunpack.c.l.b16 %v705
        %v803 = vunpack.c.h.b16 %v705
        %v804 = vunpack.c.l.b16 %v706
        %v805 = vunpack.c.h.b16 %v706
        %v806 = vunpack.c.l.b16 %v707
        %v807 = vunpack.c.h.b16 %v707
        %v808 = vunpack.c.l.b16 %v708
        %v809 = vunpack.c.h.b16 %v708
        %v810 = vunpack.c.l.b16 %v709
        %v811 = vunpack.c.h.b16 %v709
        %v812 = vunpack.c.l.b16 %v710
        %v813 = vunpack.c.h.b16 %v710
        %v814 = vunpack.c.l.b16 %v711
        %v815 = vunpack.c.h.b16 %v711
        %v816 = vunpack.c.l.b16 %v712
        %v817 = vunpack.c.h.b16 %v712
        %v818 = vunpack.c.l.b16 %v713
        %v819 = vunpack.c.h.b16 %v713
        %v820 = vunpack.c.l.b16 %v714
        %v821 = vunpack.c.h.b16 %v714
        %v822 = vunpack.c.l.b16 %v715
        %v823 = vunpack.c.h.b16 %v715
        %v824 = vpack.c.b16 %v762, %v760
        %v825 = vpack.c.b16 %v763, %v761
        %v826 = vpack.c.b16 %v766, %v764
        %v827 = vpack.c.b16 %v767, %v765
        %v828 = vpack.c.b16 %v770, %v768
        %v829 = vpack.c.b16 %v771, %v769
        %v830 = vpack.c.b16 %v774, %v772
        %v831 = vpack.c.b16 %v775, %v773
        %v832 = vpack.c.b16 %v778, %v776
        %v833 = vpack.c.b16 %v779, %v777
        %v834 = vpack.c.b16 %v782, %v780
        %v835 = vpack.c.b16 %v783, %v781
        %v836 = vpack.c.b16 %v786, %v784
        %v837 = vpack.c.b16 %v787, %v785
        %v838 = vpack.c.b16 %v790, %v788
        %v839 = vpack.c.b16 %v791, %v789
        %v840 = vpack.c.b16 %v794, %v792
        %v841 = vpack.c.b16 %v795, %v793
        %v842 = vpack.c.b16 %v798, %v796
        %v843 = vpack.c.b16 %v799, %v797
        %v844 = vpack.c.b16 %v802, %v800
        %v845 = vpack.c.b16 %v803, %v801
        %v846 = vpack.c.b16 %v806, %v804
        %v847 = vpack.c.b16 %v807, %v805
        %v848 = vpack.c.b16 %v810, %v808
        %v849 = vpack.c.b16 %v811, %v809
        %v850 = vpack.c.b16 %v814, %v812
        %v851 = vpack.c.b16 %v815, %v813
        %v852 = vpack.c.b16 %v818, %v816
        %v853 = vpack.c.b16 %v819, %v817
        %v854 = vpack.c.b16 %v822, %v820
        %v855 = vpack.c.b16 %v823, %v821
        %888 = vmatprep.subr.bf16.mxu0 %v825
        %889 = vmatpush1.bf16.msra.mxu0 %v824
        %890 = vmatprep.subr.bf16.mxu0 %v827
        %891 = vmatpush1.bf16.msra.mxu0 %v826
        %892 = vmatprep.subr.bf16.mxu0 %v829
        %893 = vmatpush1.bf16.msra.mxu0 %v828
        %894 = vmatprep.subr.bf16.mxu0 %v831
        %895 = vmatpush1.bf16.msra.mxu0 %v830
        %896 = vmatprep.subr.bf16.mxu0 %v833
        %897 = vmatpush1.bf16.msra.mxu0 %v832
        %898 = vmatprep.subr.bf16.mxu0 %v835
        %899 = vmatpush1.bf16.msra.mxu0 %v834
        %900 = vmatprep.subr.bf16.mxu0 %v837
        %901 = vmatpush1.bf16.msra.mxu0 %v836
        %902 = vmatprep.subr.bf16.mxu0 %v839
        %903 = vmatpush1.bf16.msra.mxu0 %v838
        %904 = vmatprep.subr.bf16.mxu0 %v841
        %905 = vmatpush1.bf16.msra.mxu0 %v840
        %906 = vmatprep.subr.bf16.mxu0 %v843
        %907 = vmatpush1.bf16.msra.mxu0 %v842
        %908 = vmatprep.subr.bf16.mxu0 %v845
        %909 = vmatpush1.bf16.msra.mxu0 %v844
        %910 = vmatprep.subr.bf16.mxu0 %v847
        %911 = vmatpush1.bf16.msra.mxu0 %v846
        %912 = vmatprep.subr.bf16.mxu0 %v849
        %913 = vmatpush1.bf16.msra.mxu0 %v848
        %914 = vmatprep.subr.bf16.mxu0 %v851
        %915 = vmatpush1.bf16.msra.mxu0 %v850
        %916 = vmatprep.subr.bf16.mxu0 %v853
        %917 = vmatpush1.bf16.msra.mxu0 %v852
        %918 = vmatprep.subr.bf16.mxu0 %v855
        %919 = vmatpush1.bf16.msra.mxu0 %v854
        %920 = vmatprep.mubr.bf16.mxu0 %v681
        %921 = vmatmul.mubr.bf16.gmra.mrb[0].mxu0 %v680
        %v922 = vpop.f32.mrb[0].mxu0
        %v923 = vadd.f32 %v721, %v922
        %v924 = vpop.f32.mrb[0].mxu0
        %v925 = vadd.f32 %v725, %v924
        %v926 = vpop.f32.mrb[0].mxu0
        %v927 = vadd.f32 %v721, %v926
        %v928 = vpop.f32.mrb[0].mxu0
        %v929 = vadd.f32 %v725, %v928
        %930 = vmatprep.mubr.bf16.mxu0 %v683
        %931 = vmatmul.mubr.bf16.gmra.mrb[0].mxu0 %v682
        %v932 = vpop.f32.mrb[0].mxu0
        %v933 = vadd.f32 %v721, %v932
        %v934 = vpop.f32.mrb[0].mxu0
        %v935 = vadd.f32 %v725, %v934
        %v936 = vpop.f32.mrb[0].mxu0
        %v937 = vpop.f32.mrb[0].mxu0
        %938 = vdwg.mxu0
        %v939 = vld [vmem:[%s7] sm:$0x3]
        %v940 = vld [vmem:[%s8] sm:$0x3]
        %v941 = vadd.f32 %v923, %v925
        %942 = vadd.xlane.f32.xlu0 %v941
        %v943 = vpop.xlane.xlu0 %942
        %v944 = vadd.f32 %v927, %v929
        %945 = vadd.xlane.f32.xlu0 %v944
        %v946 = vpop.xlane.xlu0 %945
        %v947 = vadd.f32 %v933, %v935
        %948 = vadd.xlane.f32.xlu0 %v947
        %v949 = vpop.xlane.xlu0 %948
        %v950 = vmul.f32 %v943, %v600
        %v951 = vmul.f32 %v946, %v600
        %v952 = vmul.f32 %v949, %v600
        %v953 = vsub.f32 %v923, %v950
        %v954 = vsub.f32 %v925, %v950
        %v955 = vsub.f32 %v927, %v951
        %v956 = vsub.f32 %v929, %v951
        %v957 = vsub.f32 %v933, %v952
        %v958 = vsub.f32 %v935, %v952
        %v959 = vmul.f32 %v953, %v953
        %v960 = vmul.f32 %v954, %v954
        %v961 = vmul.f32 %v955, %v955
        %v962 = vmul.f32 %v956, %v956
        %v963 = vmul.f32 %v957, %v957
        %v964 = vmul.f32 %v958, %v958
        %v965 = vadd.f32 %v959, %v960
        %966 = vadd.xlane.f32.xlu0 %v965
        %v967 = vpop.xlane.xlu0 %966
        %v968 = vadd.f32 %v961, %v962
        %969 = vadd.xlane.f32.xlu0 %v968
        %v970 = vpop.xlane.xlu0 %969
        %v971 = vadd.f32 %v963, %v964
        %972 = vadd.xlane.f32.xlu0 %v971
        %v973 = vpop.xlane.xlu0 %972
        %v974 = vmul.f32 %v967, %v600
        %v975 = vmul.f32 %v970, %v600
        %v976 = vmul.f32 %v973, %v600
        %v977 = vadd.f32 %v974, 1e-05
        %v978 = vadd.f32 %v975, 1e-05
        %v979 = vadd.f32 %v976, 1e-05
        %v980 = vrsqrt.pop %v977
        %v981 = vrsqrt.pop %v978
        %v982 = vrsqrt.pop %v979
        %v983 = vmul.f32 %v953, %v980
        %v984 = vmul.f32 %v954, %v980
        %v985 = vmul.f32 %v955, %v981
        %v986 = vmul.f32 %v956, %v981
        %v987 = vmul.f32 %v957, %v982
        %v988 = vmul.f32 %v958, %v982
        %v990 = vlaneseq
        %v991 = vshrl.u32 %v990, 7
        %v992 = vsub.s32 0, %v991
        %v993 = vrot.slane %v939, %v992
        %v994 = vlaneseq
        %v995 = vshrl.u32 %v994, 7
        %v996 = vsub.s32 1, %v995
        %v997 = vrot.slane %v939, %v996
        %v1000 = vmul.f32 %v983, %v993
        %v1001 = vmul.f32 %v984, %v997
        %v1002 = vmul.f32 %v985, %v993
        %v1003 = vmul.f32 %v986, %v997
        %v1004 = vmul.f32 %v987, %v993
        %v1005 = vmul.f32 %v988, %v997
        %v1007 = vlaneseq
        %v1008 = vshrl.u32 %v1007, 7
        %v1009 = vsub.s32 0, %v1008
        %v1010 = vrot.slane %v940, %v1009
        %v1011 = vlaneseq
        %v1012 = vshrl.u32 %v1011, 7
        %v1013 = vsub.s32 1, %v1012
        %v1014 = vrot.slane %v940, %v1013
        %v1017 = vadd.f32 %v1000, %v1010
        %v1018 = vadd.f32 %v1001, %v1014
        %v1019 = vadd.f32 %v1002, %v1010
        %v1020 = vadd.f32 %v1003, %v1014
        %v1021 = vadd.f32 %v1004, %v1010
        %v1022 = vadd.f32 %v1005, %v1014
        %v1023 = vmax.f32 %v1017, 0.0
        %v1024 = vmax.f32 %v1018, 0.0
        %v1025 = vmax.f32 %v1019, 0.0
        %v1026 = vmax.f32 %v1020, 0.0
        %v1027 = vmax.f32 %v1021, 0.0
        %v1028 = vmax.f32 %v1022, 0.0
        %v1029 = vpack.c.bf16 %v1025, %v1023
        %v1030 = vpack.c.bf16 %v1026, %v1024
        %v1031 = vpack.c.bf16 %v1027, %v1027
        %v1032 = vpack.c.bf16 %v1028, %v1028
        %v1033 = vld [vmem:[#allocation4] sm:$0xf]
        %v1034 = vld [vmem:[#allocation4 + $0x4] sm:$0xf]
        %v1035 = vld [vmem:[#allocation4 + $0x8] sm:$0xf]
        %v1036 = vld [vmem:[#allocation4 + $0xc] sm:$0xf]
        %v1037 = vld [vmem:[#allocation4 + $0x10] sm:$0xf]
        %v1038 = vld [vmem:[#allocation4 + $0x14] sm:$0xf]
        %v1039 = vld [vmem:[#allocation4 + $0x18] sm:$0xf]
        %v1040 = vld [vmem:[#allocation4 + $0x1c] sm:$0xf]
        %v1041 = vld [vmem:[#allocation4 + $0x20] sm:$0xf]
        %v1042 = vld [vmem:[#allocation4 + $0x24] sm:$0xf]
        %v1043 = vld [vmem:[#allocation4 + $0x28] sm:$0xf]
        %v1044 = vld [vmem:[#allocation4 + $0x2c] sm:$0xf]
        %v1045 = vld [vmem:[#allocation4 + $0x30] sm:$0xf]
        %v1046 = vld [vmem:[#allocation4 + $0x34] sm:$0xf]
        %v1047 = vld [vmem:[#allocation4 + $0x38] sm:$0xf]
        %v1048 = vld [vmem:[#allocation4 + $0x3c] sm:$0xf]
        %v1049 = vld [vmem:[#allocation4 + $0x40] sm:$0xf]
        %v1050 = vld [vmem:[#allocation4 + $0x44] sm:$0xf]
        %v1051 = vld [vmem:[#allocation4 + $0x48] sm:$0xf]
        %v1052 = vld [vmem:[#allocation4 + $0x4c] sm:$0xf]
        %v1053 = vld [vmem:[#allocation4 + $0x50] sm:$0xf]
        %v1054 = vld [vmem:[#allocation4 + $0x54] sm:$0xf]
        %v1055 = vld [vmem:[#allocation4 + $0x58] sm:$0xf]
        %v1056 = vld [vmem:[#allocation4 + $0x5c] sm:$0xf]
        %v1057 = vld [vmem:[#allocation4 + $0x60] sm:$0xf]
        %v1058 = vld [vmem:[#allocation4 + $0x64] sm:$0xf]
        %v1059 = vld [vmem:[#allocation4 + $0x68] sm:$0xf]
        %v1060 = vld [vmem:[#allocation4 + $0x6c] sm:$0xf]
        %v1061 = vld [vmem:[#allocation4 + $0x70] sm:$0xf]
        %v1062 = vld [vmem:[#allocation4 + $0x74] sm:$0xf]
        %v1063 = vld [vmem:[#allocation4 + $0x78] sm:$0xf]
        %v1064 = vld [vmem:[#allocation4 + $0x7c] sm:$0xf]
        %v1065 = vld [vmem:[%s10] sm:$0x1]
        %v1067 = vlaneseq
        %v1068 = vshrl.u32 %v1067, 7
        %v1069 = vsub.s32 0, %v1068
        %v1070 = vrot.slane %v1065, %v1069
        %v1104 = vunpack.c.l.b16 %v1033
        %v1105 = vunpack.c.l.b16 %v1034
        %v1106 = vunpack.c.l.b16 %v1035
        %v1107 = vunpack.c.l.b16 %v1036
        %v1108 = vunpack.c.l.b16 %v1037
        %v1109 = vunpack.c.l.b16 %v1038
        %v1110 = vunpack.c.l.b16 %v1039
        %v1111 = vunpack.c.l.b16 %v1040
        %v1112 = vunpack.c.l.b16 %v1041
        %v1113 = vunpack.c.l.b16 %v1042
        %v1114 = vunpack.c.l.b16 %v1043
        %v1115 = vunpack.c.l.b16 %v1044
        %v1116 = vunpack.c.l.b16 %v1045
        %v1117 = vunpack.c.l.b16 %v1046
        %v1118 = vunpack.c.l.b16 %v1047
        %v1119 = vunpack.c.l.b16 %v1048
        %v1120 = vunpack.c.l.b16 %v1049
        %v1121 = vunpack.c.l.b16 %v1050
        %v1122 = vunpack.c.l.b16 %v1051
        %v1123 = vunpack.c.l.b16 %v1052
        %v1124 = vunpack.c.l.b16 %v1053
        %v1125 = vunpack.c.l.b16 %v1054
        %v1126 = vunpack.c.l.b16 %v1055
        %v1127 = vunpack.c.l.b16 %v1056
        %v1128 = vunpack.c.l.b16 %v1057
        %v1129 = vunpack.c.l.b16 %v1058
        %v1130 = vunpack.c.l.b16 %v1059
        %v1131 = vunpack.c.l.b16 %v1060
        %v1132 = vunpack.c.l.b16 %v1061
        %v1133 = vunpack.c.l.b16 %v1062
        %v1134 = vunpack.c.l.b16 %v1063
        %v1135 = vunpack.c.l.b16 %v1064
        %v1136 = vpack.c.b16 %v1105, %v1104
        %v1137 = vpack.c.b16 %v1107, %v1106
        %v1138 = vpack.c.b16 %v1109, %v1108
        %v1139 = vpack.c.b16 %v1111, %v1110
        %v1140 = vpack.c.b16 %v1113, %v1112
        %v1141 = vpack.c.b16 %v1115, %v1114
        %v1142 = vpack.c.b16 %v1117, %v1116
        %v1143 = vpack.c.b16 %v1119, %v1118
        %v1144 = vpack.c.b16 %v1121, %v1120
        %v1145 = vpack.c.b16 %v1123, %v1122
        %v1146 = vpack.c.b16 %v1125, %v1124
        %v1147 = vpack.c.b16 %v1127, %v1126
        %v1148 = vpack.c.b16 %v1129, %v1128
        %v1149 = vpack.c.b16 %v1131, %v1130
        %v1150 = vpack.c.b16 %v1133, %v1132
        %v1151 = vpack.c.b16 %v1135, %v1134
        %1168 = vmatprep.subr.bf16.mxu0 0
        %1169 = vmatpush1.bf16.msra.mxu0 %v1136
        %1170 = vmatprep.subr.bf16.mxu0 0
        %1171 = vmatpush1.bf16.msra.mxu0 %v1137
        %1172 = vmatprep.subr.bf16.mxu0 0
        %1173 = vmatpush1.bf16.msra.mxu0 %v1138
        %1174 = vmatprep.subr.bf16.mxu0 0
        %1175 = vmatpush1.bf16.msra.mxu0 %v1139
        %1176 = vmatprep.subr.bf16.mxu0 0
        %1177 = vmatpush1.bf16.msra.mxu0 %v1140
        %1178 = vmatprep.subr.bf16.mxu0 0
        %1179 = vmatpush1.bf16.msra.mxu0 %v1141
        %1180 = vmatprep.subr.bf16.mxu0 0
        %1181 = vmatpush1.bf16.msra.mxu0 %v1142
        %1182 = vmatprep.subr.bf16.mxu0 0
        %1183 = vmatpush1.bf16.msra.mxu0 %v1143
        %1184 = vmatprep.subr.bf16.mxu0 0
        %1185 = vmatpush1.bf16.msra.mxu0 %v1144
        %1186 = vmatprep.subr.bf16.mxu0 0
        %1187 = vmatpush1.bf16.msra.mxu0 %v1145
        %1188 = vmatprep.subr.bf16.mxu0 0
        %1189 = vmatpush1.bf16.msra.mxu0 %v1146
        %1190 = vmatprep.subr.bf16.mxu0 0
        %1191 = vmatpush1.bf16.msra.mxu0 %v1147
        %1192 = vmatprep.subr.bf16.mxu0 0
        %1193 = vmatpush1.bf16.msra.mxu0 %v1148
        %1194 = vmatprep.subr.bf16.mxu0 0
        %1195 = vmatpush1.bf16.msra.mxu0 %v1149
        %1196 = vmatprep.subr.bf16.mxu0 0
        %1197 = vmatpush1.bf16.msra.mxu0 %v1150
        %1198 = vmatprep.subr.bf16.mxu0 0
        %1199 = vmatpush1.bf16.msra.mxu0 %v1151
        %1200 = vmatprep.mubr.bf16.mxu0 %v1030
        %1201 = vmatmul.mubr.bf16.gmra.mrb[0].mxu0 %v1029
        %v1202 = vpop.f32.mrb[0].mxu0
        %v1203 = vadd.f32 %v1070, %v1202
        %v1204 = vpop.f32.mrb[0].mxu0
        %v1205 = vpop.f32.mrb[0].mxu0
        %v1206 = vadd.f32 %v1070, %v1205
        %v1207 = vpop.f32.mrb[0].mxu0
        %1208 = vmatprep.mubr.bf16.mxu0 %v1032
        %1209 = vmatmul.mubr.bf16.gmra.mrb[0].mxu0 %v1031
        %v1210 = vpop.f32.mrb[0].mxu0
        %v1211 = vadd.f32 %v1070, %v1210
        %v1212 = vpop.f32.mrb[0].mxu0
        %v1213 = vpop.f32.mrb[0].mxu0
        %v1214 = vpop.f32.mrb[0].mxu0
        %1215 = vdwg.mxu0
        %v1216 = vld [vmem:[%s11] sm:$0x1]
        %v1218 = vlaneseq
        %v1219 = vshrl.u32 %v1218, 7
        %v1220 = vsub.s32 0, %v1219
        %v1221 = vrot.slane %v1216, %v1220
        %v1223 = vmax.f32 %v1203, %v1221
        %v1224 = vmax.f32 %v1206, %v1221
        %v1225 = vmax.f32 %v1211, %v1221
        %v1226 = vld [vmem:[%s12] sm:$0x1]
        %v1228 = vlaneseq
        %v1229 = vshrl.u32 %v1228, 7
        %v1230 = vsub.s32 0, %v1229
        %v1231 = vrot.slane %v1226, %v1230
        %v1233 = vmin.f32 %v1223, %v1231
        %v1234 = vmin.f32 %v1224, %v1231
        %v1235 = vmin.f32 %v1225, %v1231
        %vm1236 = vcmask 64512
        %1237 = vst.msk [vmem:[%s472] sm:$0xff] %vm1236, %v1233
        %1238 = vst.msk [vmem:[%s472 + $0x8] sm:$0xff] %vm1236, %v1234
        %1239 = vst.msk [vmem:[%s472 + $0x10] sm:$0xff] %vm1236, %v1235
        %s1240 = smul.u32 3, %s26
        %p1241 = scmp.lt.s32.totalorder %s1240, 5
        %s1242 = scalar_select %p1241, %s1240, 5
        %s1243 = smul.addr %s1242, 8
        %s1244 = scalar_lea.vmem %s13, %s1243
        // Predicated region
        $region81: #{tpu_custom_call.1} parent=71 // pred_check
          %p1245 = pneg %p322
        $region82: #{tpu_custom_call.1} parent=71 // pred_check_branch
          %1247 = sbr.rel (%p1245) target = $region84
        $region83: #{tpu_custom_call.1} parent=71 // pred_region
          %s1248 = smul.u32 3, %s26
        $region84: #{tpu_custom_call.1} parent=71 // pred_fallthru
          _
      $region72: #{tpu_custom_call.1} parent=5 // pred_fallthru
        _
      %p1249 = scmp.le.s32.totalorder 2, %s21
      // Predicated region
      $region85: #{tpu_custom_call.1} parent=5 // pred_check
        %p1250 = pneg %p1249
      $region86: #{tpu_custom_call.1} parent=5 // pred_check_branch
        %1252 = sbr.rel (%p1250) target = $region88
      $region87: #{tpu_custom_call.1} parent=5 // pred_region
        %s1253 = ssub.s32 %s21, 2
        // Predicated region
        $region89: #{tpu_custom_call.1} parent=87 // pred_check
          %p1254 = pneg %p328
        $region90: #{tpu_custom_call.1} parent=87 // pred_check_branch
          %1256 = sbr.rel (%p1254) target = $region92
        $region91: #{tpu_custom_call.1} parent=87 // pred_region
          %s1257 = smul.u32 3, %s27
          %p1258 = scmp.lt.s32.totalorder %s1257, 5
          %s1259 = scalar_select %p1258, %s1257, 5
          %s1260 = smul.addr %s1259, 8
          %s1261 = scalar_lea.vmem %s13, %s1260
        $region92: #{tpu_custom_call.1} parent=87 // pred_fallthru
          _
      $region88: #{tpu_custom_call.1} parent=5 // pred_fallthru
        _
    $region6: #{tpu_custom_call.1} parent=1 // loop_footer
      %s25 = sadd.s32 1, %s21
    $region7: #{tpu_custom_call.1} parent=1 // loop_footer_branch
      %20 = sbr.rel target = $region3
    $region8: #{tpu_custom_call.1} parent=1 // loop_exit
      _
    %1262 = vsyncpa [#allocation3], 1
    %s1263 = scalar_lea.sflag [#allocation3], 1
    %1264 = vsyncpa %s1263, 1
    %1265 = vsyncpa [#allocation5], 1

</llo_original>
